<compile_context>
chip_gen: v5e
topology: v5e:2x2
jax: 0.10.0
libtpu: 0.0.40
codegen_flags: <defaults>
</compile_context>

<pallas_src>
import math

import jax
import jax.numpy as jnp
from jax.experimental import pallas as pl
from jax.experimental.pallas import tpu as pltpu


def _sigmoid_via_tanh(x):
    # sigmoid(x) == 0.5*(tanh(0.5*x) + 1): one EUP op + cheap VPU mul/add,
    # avoids the full-precision divide of 1/(1+exp(-x)) on the recurrence path.
    return 0.5 * jnp.tanh(0.5 * x) + 0.5


def _decoder_kernel(
    # inputs
    word_ref, h0_ref, c0_ref, enc_ref, enc_t_ref, cov_ref, attw_in_ref,
    w_ih_ref, w_hh_ref, b_gates_ref,
    w_attn_ref, w_cov_ref, b_ac_ref,
    w_whc_h_ref, w_whc_c_ref, b_whc_ref, w_ws_ref, b_ws_ref,
    # outputs
    y_ref, hn_ref, cn_ref, cov_out_ref, attw_out_ref,
):
    H = hn_ref.shape[1]
    T = word_ref.shape[0]
    bf16 = jnp.bfloat16

    # coverage_vec = coverage_vec + attention_weights  (exact fp32)
    cov_new = cov_ref[...] + attw_in_ref[...]
    cov_out_ref[...] = cov_new

    # ---- single-layer LSTM, batch=1, gate columns repacked to (i, f, o, g) ----
    # Input-side projection hoisted out of the recurrence (M = T fills the MXU
    # better and removes one matmul + one FIFO pop from every step).
    x_gates = jnp.dot(word_ref[...], w_ih_ref[...],
                      preferred_element_type=jnp.float32) + b_gates_ref[...]  # (T, 4H) fp32

    w_hh = w_hh_ref[...]                       # (H, 4H) bf16
    h = h0_ref[...]                            # (1, H)  fp32
    c = c0_ref[...]                            # (1, H)  fp32
    # TODO(synk): if T can be large in practice, switch to lax.fori_loop with a
    # small unroll factor; T is a small static decode-step length here.
    for t in range(T):
        gates = x_gates[t:t + 1, :] + jnp.dot(
            h.astype(bf16), w_hh, preferred_element_type=jnp.float32)   # (1, 4H) fp32
        sig = _sigmoid_via_tanh(gates[:, :3 * H])       # one whole-slice EUP op
        i = sig[:, 0 * H:1 * H]
        f = sig[:, 1 * H:2 * H]
        o = sig[:, 2 * H:3 * H]
        g = jnp.tanh(gates[:, 3 * H:])
        c = f * c + i * g
        h = o * jnp.tanh(c)
    hn_ref[...] = h
    cn_ref[...] = c

    h_bf = h.astype(bf16)

    # ---- coverage-augmented attention (biases pre-folded in the wrapper) ----
    attn_cov = (jnp.dot(h_bf, w_attn_ref[...], preferred_element_type=jnp.float32)
                + jnp.dot(cov_new.astype(bf16), w_cov_ref[...],
                          preferred_element_type=jnp.float32)
                + b_ac_ref[...])                                        # (1, H)

    # attn_prod = attn_cov @ enc.T  -> (1, S); encoder pre-transposed outside.
    attn_prod = jnp.dot(attn_cov.astype(bf16), enc_t_ref[...],
                        preferred_element_type=jnp.float32)

    m = jnp.max(attn_prod, axis=1, keepdims=True)
    e = jnp.exp(attn_prod - m)
    attw = e / jnp.sum(e, axis=1, keepdims=True)        # softmax, dim=1 (fp32)
    attw_out_ref[...] = attw

    context = jnp.dot(attw.astype(bf16), enc_ref[...],
                      preferred_element_type=jnp.float32)               # (1, H)

    # Whc split in the wrapper -> no in-kernel concatenate of (1, H) vregs.
    out_hc = jnp.tanh(
        jnp.dot(h_bf, w_whc_h_ref[...], preferred_element_type=jnp.float32)
        + jnp.dot(context.astype(bf16), w_whc_c_ref[...],
                  preferred_element_type=jnp.float32)
        + b_whc_ref[...])                                               # (1, H)

    logits = jnp.dot(out_hc.astype(bf16), w_ws_ref[...],
                     preferred_element_type=jnp.float32) + b_ws_ref[...]  # (1, V)

    # log_softmax, dim=1
    lm = jnp.max(logits, axis=1, keepdims=True)
    shifted = logits - lm
    y_ref[...] = shifted - jnp.log(jnp.sum(jnp.exp(shifted), axis=1, keepdims=True))


def lstm_ques_cov_forward(word, hidden, encoder_output, coverage_vec,
                          attention_weights, params):
    """word: (1, T, emb+ques); hidden: ((1,1,H),(1,1,H)); encoder_output: (*, H);
    coverage_vec / attention_weights: (1, max_sent_len)."""
    h0, c0 = hidden
    _, T, D_in = word.shape
    H = params["w_hh"].shape[0]
    S = params["w_cov"].shape[0]
    V = params["w_ws"].shape[1]

    mxu_dtype = jnp.bfloat16   # MXU operands; element-wise math stays fp32

    def reorder_gates(w):
        # PyTorch gate order (i, f, g, o) -> kernel order (i, f, o, g)
        return jnp.concatenate(
            [w[..., :2 * H], w[..., 3 * H:4 * H], w[..., 2 * H:3 * H]], axis=-1)

    # -- one-time packing (HLO outside the kernel; trivial sizes) --------------
    word2d = word.reshape(T, D_in).astype(mxu_dtype)
    h0_2d = h0.reshape(1, H).astype(jnp.float32)
    c0_2d = c0.reshape(1, H).astype(jnp.float32)
    enc = encoder_output.reshape(-1, H).astype(mxu_dtype)     # (S, H)
    enc_t = jnp.transpose(enc)                                # (H, S) — no in-kernel XLU transpose

    w_ih = reorder_gates(params["w_ih"]).astype(mxu_dtype)    # (D_in, 4H)
    w_hh = reorder_gates(params["w_hh"]).astype(mxu_dtype)    # (H, 4H)
    b_gates = reorder_gates(params["b_ih"] + params["b_hh"])  # (1, 4H) fp32
    w_attn = params["w_attn"].astype(mxu_dtype)               # (H, H)
    w_cov = params["w_cov"].astype(mxu_dtype)                 # (S, H)
    b_ac = params["b_attn"] + params["b_cov"]                 # (1, H) fp32
    w_whc_h = params["w_whc"][:H].astype(mxu_dtype)           # (H, H)
    w_whc_c = params["w_whc"][H:].astype(mxu_dtype)           # (H, H)
    b_whc = params["b_whc"]                                   # (1, H) fp32
    w_ws = params["w_ws"].astype(mxu_dtype)                   # (H, V)
    b_ws = params["b_ws"]                                     # (1, V) fp32

    inputs = (word2d, h0_2d, c0_2d, enc, enc_t,
              coverage_vec.astype(jnp.float32), attention_weights.astype(jnp.float32),
              w_ih, w_hh, b_gates, w_attn, w_cov, b_ac,
              w_whc_h, w_whc_c, b_whc, w_ws, b_ws)

    out_shapes = (
        jax.ShapeDtypeStruct((1, V), jnp.float32),   # y (log-probs)
        jax.ShapeDtypeStruct((1, H), jnp.float32),   # h_n
        jax.ShapeDtypeStruct((1, H), jnp.float32),   # c_n
        jax.ShapeDtypeStruct((1, S), jnp.float32),   # updated coverage
        jax.ShapeDtypeStruct((1, S), jnp.float32),   # new attention weights
    )

    # Advisory cost hint so XLA can overlap this small latency-bound call.
    flops = 2 * (T * D_in * 4 * H        # hoisted x @ W_ih
                 + T * H * 4 * H         # h @ W_hh per step
                 + H * H + S * H         # attn / coverage projections
                 + H * S + S * H         # attn_prod + context
                 + 2 * H * H             # Whc (split)
                 + H * V)                # Ws
    transcendentals = T * 4 * H + S + H + V
    bytes_accessed = (sum(int(a.size) * a.dtype.itemsize for a in inputs)
                      + sum(int(math.prod(o.shape)) * 4 for o in out_shapes))

    vmem = pl.BlockSpec(memory_space=pltpu.MemorySpace.VMEM)
    y, hn, cn, cov_new, attw = pl.pallas_call(
        _decoder_kernel,
        out_shape=out_shapes,
        in_specs=[vmem] * len(inputs),
        out_specs=tuple([vmem] * len(out_shapes)),
        cost_estimate=pl.CostEstimate(flops=flops,
                                      transcendentals=transcendentals,
                                      bytes_accessed=bytes_accessed),
    )(*inputs)

    return (y.reshape(1, 1, V),
            (hn.reshape(1, 1, H), cn.reshape(1, 1, H)),
            cov_new, attw)


def init_params(key, embedding_dim, ques_dim, hidden_dim, vocab_size, max_sent_len):
    D_in = embedding_dim + ques_dim
    H, V, S = hidden_dim, vocab_size, max_sent_len
    ks = jax.random.split(key, 6)

    def xavier(k, out_f, in_f):  # torch xavier_uniform_, gain=1, weight (out, in)
        bound = (6.0 / (in_f + out_f)) ** 0.5
        return jax.random.uniform(k, (out_f, in_f), jnp.float32, -bound, bound)

    def linear(k, in_f, out_f):  # torch default Linear init, returned pre-transposed
        kw, kb = jax.random.split(k)
        bound = 1.0 / (in_f ** 0.5)
        w = jax.random.uniform(kw, (out_f, in_f), jnp.float32, -bound, bound)
        b = jax.random.uniform(kb, (1, out_f), jnp.float32, -bound, bound)
        return w.T, b

    w_attn, b_attn = linear(ks[2], H, H)
    w_cov, b_cov = linear(ks[3], S, H)
    w_whc, b_whc = linear(ks[4], 2 * H, H)
    w_ws, b_ws = linear(ks[5], H, V)
    return dict(
        w_ih=xavier(ks[0], 4 * H, D_in).T,        # (D_in, 4H), torch gate order (i,f,g,o)
        w_hh=xavier(ks[1], 4 * H, H).T,           # (H, 4H)
        b_ih=jnp.zeros((1, 4 * H), jnp.float32),  # init_weight: constant 0
        b_hh=jnp.zeros((1, 4 * H), jnp.float32),
        w_attn=w_attn, b_attn=b_attn,
        w_cov=w_cov, b_cov=b_cov,
        w_whc=w_whc, b_whc=b_whc,
        w_ws=w_ws, b_ws=b_ws,
    )


def reference_forward(word, hidden, encoder_output, coverage_vec,
                      attention_weights, params):
    """Pure-JAX fp32 mirror of the PyTorch forward, for a numerical sanity check."""
    h, c = hidden
    H = params["w_hh"].shape[0]
    h = h.reshape(1, H)
    c = c.reshape(1, H)
    cov_new = coverage_vec + attention_weights
    bias = params["b_ih"] + params["b_hh"]
    T = word.shape[1]
    for t in range(T):
        x_t = word[0, t:t + 1, :]
        gates = x_t @ params["w_ih"] + h @ params["w_hh"] + bias
        i = jax.nn.sigmoid(gates[:, :H])
        f = jax.nn.sigmoid(gates[:, H:2 * H])
        g = jnp.tanh(gates[:, 2 * H:3 * H])
        o = jax.nn.sigmoid(gates[:, 3 * H:])
        c = f * c + i * g
        h = o * jnp.tanh(c)
    enc = encoder_output.reshape(-1, H)
    attn_h = h @ params["w_attn"] + params["b_attn"]
    con_ll = cov_new @ params["w_cov"] + params["b_cov"]
    attn_cov = attn_h + con_ll
    attn_prod = attn_cov @ enc.T
    aw = jax.nn.softmax(attn_prod, axis=1)
    context = aw @ enc
    hc = jnp.concatenate([h, context], axis=1)
    out_hc = jnp.tanh(hc @ params["w_whc"] + params["b_whc"])
    logits = out_hc @ params["w_ws"] + params["b_ws"]
    y = jax.nn.log_softmax(logits, axis=1)
    return y[None], (h[None], c[None]), cov_new, aw


if __name__ == "__main__":
    embedding_dim, ques_dim, hidden_dim, vocab_size, max_sent_len = 16, 16, 32, 64, 8
    D_in = embedding_dim + ques_dim

    key = jax.random.PRNGKey(0)
    kp, kw, kh, kc, ke, kcov, ka = jax.random.split(key, 7)

    params = init_params(kp, embedding_dim, ques_dim, hidden_dim, vocab_size, max_sent_len)

    word = jax.random.normal(kw, (1, 1, D_in), jnp.float32)          # (batch=1, seq=1, emb+ques)
    h0 = jax.random.normal(kh, (1, 1, hidden_dim), jnp.float32)
    c0 = jax.random.normal(kc, (1, 1, hidden_dim), jnp.float32)
    encoder_output = jax.random.normal(ke, (1, max_sent_len, hidden_dim), jnp.float32)
    coverage_vec = jnp.abs(jax.random.normal(kcov, (1, max_sent_len), jnp.float32))
    attention_weights = jax.nn.softmax(
        jax.random.normal(ka, (1, max_sent_len), jnp.float32), axis=1)

    y, (hn, cn), cov_new, attw = lstm_ques_cov_forward(
        word, (h0, c0), encoder_output, coverage_vec, attention_weights, params)
    jax.block_until_ready((y, hn, cn, cov_new, attw))

    # sanity check against a pure-JAX fp32 reference (kernel uses bf16 MXU operands,
    # hence the relaxed tolerance)
    y_r, (hn_r, cn_r), cov_r, attw_r = reference_forward(
        word, (h0, c0), encoder_output, coverage_vec, attention_weights, params)
    assert jnp.allclose(y, y_r, atol=5e-2, rtol=5e-2)
    assert jnp.allclose(hn, hn_r, atol=5e-2, rtol=5e-2)
    assert jnp.allclose(cn, cn_r, atol=5e-2, rtol=5e-2)
    assert jnp.allclose(cov_new, cov_r, atol=1e-5)
    assert jnp.allclose(attw, attw_r, atol=5e-2, rtol=5e-2)

    print("KERNEL_OK")
</pallas_src>

<mosaic_0001>
module attributes {stable_mosaic.version = 11 : i64} {
  func.func @_decoder_kernel(%arg0: memref<1x32xbf16, #tpu.memory_space<vmem>>, %arg1: memref<1x32xf32, #tpu.memory_space<vmem>>, %arg2: memref<1x32xf32, #tpu.memory_space<vmem>>, %arg3: memref<8x32xbf16, #tpu.memory_space<vmem>>, %arg4: memref<32x8xbf16, #tpu.memory_space<vmem>>, %arg5: memref<1x8xf32, #tpu.memory_space<vmem>>, %arg6: memref<1x8xf32, #tpu.memory_space<vmem>>, %arg7: memref<32x128xbf16, #tpu.memory_space<vmem>>, %arg8: memref<32x128xbf16, #tpu.memory_space<vmem>>, %arg9: memref<1x128xf32, #tpu.memory_space<vmem>>, %arg10: memref<32x32xbf16, #tpu.memory_space<vmem>>, %arg11: memref<8x32xbf16, #tpu.memory_space<vmem>>, %arg12: memref<1x32xf32, #tpu.memory_space<vmem>>, %arg13: memref<32x32xbf16, #tpu.memory_space<vmem>>, %arg14: memref<32x32xbf16, #tpu.memory_space<vmem>>, %arg15: memref<1x32xf32, #tpu.memory_space<vmem>>, %arg16: memref<32x64xbf16, #tpu.memory_space<vmem>>, %arg17: memref<1x64xf32, #tpu.memory_space<vmem>>, %arg18: memref<1x64xf32, #tpu.memory_space<vmem>>, %arg19: memref<1x32xf32, #tpu.memory_space<vmem>>, %arg20: memref<1x32xf32, #tpu.memory_space<vmem>>, %arg21: memref<1x8xf32, #tpu.memory_space<vmem>>, %arg22: memref<1x8xf32, #tpu.memory_space<vmem>>) attributes {dimension_semantics = [], scalar_prefetch = 0 : i64, scratch_operands = 0 : i64, tpu.core_type = #tpu.core_type<tc>} {
    %c0 = arith.constant 0 : index
    %c0_0 = arith.constant 0 : index
    %0 = vector.load %arg5[%c0, %c0_0] : memref<1x8xf32, #tpu.memory_space<vmem>>, vector<1x8xf32>
    %c0_1 = arith.constant 0 : index
    %c0_2 = arith.constant 0 : index
    %1 = vector.load %arg6[%c0_1, %c0_2] : memref<1x8xf32, #tpu.memory_space<vmem>>, vector<1x8xf32>
    %2 = arith.addf %0, %1 : vector<1x8xf32>
    %c0_3 = arith.constant 0 : index
    %c0_4 = arith.constant 0 : index
    %3 = vector.load %arg21[%c0_3, %c0_4] : memref<1x8xf32, #tpu.memory_space<vmem>>, vector<1x8xf32>
    tpu.vector_store %arg21[%c0_3, %c0_4], %2 {strides = array<i32>} : memref<1x8xf32, #tpu.memory_space<vmem>>, vector<1x8xf32>,
    %c0_5 = arith.constant 0 : index
    %c0_6 = arith.constant 0 : index
    %4 = vector.load %arg0[%c0_5, %c0_6] : memref<1x32xbf16, #tpu.memory_space<vmem>>, vector<1x32xbf16>
    %c0_7 = arith.constant 0 : index
    %c0_8 = arith.constant 0 : index
    %5 = vector.load %arg7[%c0_7, %c0_8] : memref<32x128xbf16, #tpu.memory_space<vmem>>, vector<32x128xbf16>
    %cst = arith.constant dense<0.000000e+00> : vector<1x128xf32>
    %6 = tpu.matmul %4, %5, %cst {dimension_numbers = #tpu.dot_dimension_numbers<[1], [0], [0], [1], [0, 0, 1, 1], [], []>} : vector<1x32xbf16>, vector<32x128xbf16>, vector<1x128xf32> -> vector<1x128xf32>
    %c0_9 = arith.constant 0 : index
    %c0_10 = arith.constant 0 : index
    %7 = vector.load %arg9[%c0_9, %c0_10] : memref<1x128xf32, #tpu.memory_space<vmem>>, vector<1x128xf32>
    %8 = arith.addf %6, %7 : vector<1x128xf32>
    %c0_11 = arith.constant 0 : index
    %c0_12 = arith.constant 0 : index
    %9 = vector.load %arg8[%c0_11, %c0_12] : memref<32x128xbf16, #tpu.memory_space<vmem>>, vector<32x128xbf16>
    %c0_13 = arith.constant 0 : index
    %c0_14 = arith.constant 0 : index
    %10 = vector.load %arg1[%c0_13, %c0_14] : memref<1x32xf32, #tpu.memory_space<vmem>>, vector<1x32xf32>
    %c0_15 = arith.constant 0 : index
    %c0_16 = arith.constant 0 : index
    %11 = vector.load %arg2[%c0_15, %c0_16] : memref<1x32xf32, #tpu.memory_space<vmem>>, vector<1x32xf32>
    %12 = arith.truncf %10 : vector<1x32xf32> to vector<1x32xbf16>
    %cst_17 = arith.constant dense<0.000000e+00> : vector<1x128xf32>
    %13 = tpu.matmul %12, %9, %cst_17 {dimension_numbers = #tpu.dot_dimension_numbers<[1], [0], [0], [1], [0, 0, 1, 1], [], []>} : vector<1x32xbf16>, vector<32x128xbf16>, vector<1x128xf32> -> vector<1x128xf32>
    %14 = arith.addf %8, %13 : vector<1x128xf32>
    %15 = vector.extract_strided_slice %14 {offsets = [0, 0], sizes = [1, 96], strides = [1, 1]} : vector<1x128xf32> to vector<1x96xf32>
    %cst_18 = arith.constant 5.000000e-01 : f32
    %16 = vector.broadcast %cst_18 : f32 to vector<1x96xf32>
    %17 = arith.mulf %16, %15 : vector<1x96xf32>
    %18 = math.tanh %17 : vector<1x96xf32>
    %cst_19 = arith.constant 5.000000e-01 : f32
    %19 = vector.broadcast %cst_19 : f32 to vector<1x96xf32>
    %20 = arith.mulf %19, %18 : vector<1x96xf32>
    %cst_20 = arith.constant 5.000000e-01 : f32
    %21 = vector.broadcast %cst_20 : f32 to vector<1x96xf32>
    %22 = arith.addf %20, %21 : vector<1x96xf32>
    %23 = vector.extract_strided_slice %22 {offsets = [0, 0], sizes = [1, 32], strides = [1, 1]} : vector<1x96xf32> to vector<1x32xf32>
    %24 = vector.extract_strided_slice %22 {offsets = [0, 32], sizes = [1, 32], strides = [1, 1]} : vector<1x96xf32> to vector<1x32xf32>
    %25 = vector.extract_strided_slice %22 {offsets = [0, 64], sizes = [1, 32], strides = [1, 1]} : vector<1x96xf32> to vector<1x32xf32>
    %26 = vector.extract_strided_slice %14 {offsets = [0, 96], sizes = [1, 32], strides = [1, 1]} : vector<1x128xf32> to vector<1x32xf32>
    %27 = math.tanh %26 : vector<1x32xf32>
    %28 = arith.mulf %24, %11 : vector<1x32xf32>
    %29 = arith.mulf %23, %27 : vector<1x32xf32>
    %30 = arith.addf %28, %29 : vector<1x32xf32>
    %31 = math.tanh %30 : vector<1x32xf32>
    %32 = arith.mulf %25, %31 : vector<1x32xf32>
    %c0_21 = arith.constant 0 : index
    %c0_22 = arith.constant 0 : index
    %33 = vector.load %arg19[%c0_21, %c0_22] : memref<1x32xf32, #tpu.memory_space<vmem>>, vector<1x32xf32>
    tpu.vector_store %arg19[%c0_21, %c0_22], %32 {strides = array<i32>} : memref<1x32xf32, #tpu.memory_space<vmem>>, vector<1x32xf32>,
    %c0_23 = arith.constant 0 : index
    %c0_24 = arith.constant 0 : index
    %34 = vector.load %arg20[%c0_23, %c0_24] : memref<1x32xf32, #tpu.memory_space<vmem>>, vector<1x32xf32>
    tpu.vector_store %arg20[%c0_23, %c0_24], %30 {strides = array<i32>} : memref<1x32xf32, #tpu.memory_space<vmem>>, vector<1x32xf32>,
    %35 = arith.truncf %32 : vector<1x32xf32> to vector<1x32xbf16>
    %c0_25 = arith.constant 0 : index
    %c0_26 = arith.constant 0 : index
    %36 = vector.load %arg10[%c0_25, %c0_26] : memref<32x32xbf16, #tpu.memory_space<vmem>>, vector<32x32xbf16>
    %cst_27 = arith.constant dense<0.000000e+00> : vector<1x32xf32>
    %37 = tpu.matmul %35, %36, %cst_27 {dimension_numbers = #tpu.dot_dimension_numbers<[1], [0], [0], [1], [0, 0, 1, 1], [], []>} : vector<1x32xbf16>, vector<32x32xbf16>, vector<1x32xf32> -> vector<1x32xf32>
    %38 = arith.truncf %2 : vector<1x8xf32> to vector<1x8xbf16>
    %c0_28 = arith.constant 0 : index
    %c0_29 = arith.constant 0 : index
    %39 = vector.load %arg11[%c0_28, %c0_29] : memref<8x32xbf16, #tpu.memory_space<vmem>>, vector<8x32xbf16>
    %cst_30 = arith.constant dense<0.000000e+00> : vector<1x32xf32>
    %40 = tpu.matmul %38, %39, %cst_30 {dimension_numbers = #tpu.dot_dimension_numbers<[1], [0], [0], [1], [0, 0, 1, 1], [], []>} : vector<1x8xbf16>, vector<8x32xbf16>, vector<1x32xf32> -> vector<1x32xf32>
    %41 = arith.addf %37, %40 : vector<1x32xf32>
    %c0_31 = arith.constant 0 : index
    %c0_32 = arith.constant 0 : index
    %42 = vector.load %arg12[%c0_31, %c0_32] : memref<1x32xf32, #tpu.memory_space<vmem>>, vector<1x32xf32>
    %43 = arith.addf %41, %42 : vector<1x32xf32>
    %44 = arith.truncf %43 : vector<1x32xf32> to vector<1x32xbf16>
    %c0_33 = arith.constant 0 : index
    %c0_34 = arith.constant 0 : index
    %45 = vector.load %arg4[%c0_33, %c0_34] : memref<32x8xbf16, #tpu.memory_space<vmem>>, vector<32x8xbf16>
    %cst_35 = arith.constant dense<0.000000e+00> : vector<1x8xf32>
    %46 = tpu.matmul %44, %45, %cst_35 {dimension_numbers = #tpu.dot_dimension_numbers<[1], [0], [0], [1], [0, 0, 1, 1], [], []>} : vector<1x32xbf16>, vector<32x8xbf16>, vector<1x8xf32> -> vector<1x8xf32>
    %cst_36 = arith.constant dense<0xFF800000> : vector<1xf32>
    %47 = vector.multi_reduction <maximumf>, %46, %cst_36 [1] : vector<1x8xf32> to vector<1xf32>
    %48 = vector.shape_cast %47 : vector<1xf32> to vector<1x1xf32>
    %49 = vector.broadcast %48 : vector<1x1xf32> to vector<1x8xf32>
    %50 = arith.subf %46, %49 : vector<1x8xf32>
    %51 = math.exp %50 : vector<1x8xf32>
    %cst_37 = arith.constant dense<0.000000e+00> : vector<1xf32>
    %52 = vector.multi_reduction <add>, %51, %cst_37 [1] : vector<1x8xf32> to vector<1xf32>
    %53 = vector.shape_cast %52 : vector<1xf32> to vector<1x1xf32>
    %54 = vector.broadcast %53 : vector<1x1xf32> to vector<1x8xf32>
    %55 = arith.divf %51, %54 : vector<1x8xf32>
    %c0_38 = arith.constant 0 : index
    %c0_39 = arith.constant 0 : index
    %56 = vector.load %arg22[%c0_38, %c0_39] : memref<1x8xf32, #tpu.memory_space<vmem>>, vector<1x8xf32>
    tpu.vector_store %arg22[%c0_38, %c0_39], %55 {strides = array<i32>} : memref<1x8xf32, #tpu.memory_space<vmem>>, vector<1x8xf32>,
    %57 = arith.truncf %55 : vector<1x8xf32> to vector<1x8xbf16>
    %c0_40 = arith.constant 0 : index
    %c0_41 = arith.constant 0 : index
    %58 = vector.load %arg3[%c0_40, %c0_41] : memref<8x32xbf16, #tpu.memory_space<vmem>>, vector<8x32xbf16>
    %cst_42 = arith.constant dense<0.000000e+00> : vector<1x32xf32>
    %59 = tpu.matmul %57, %58, %cst_42 {dimension_numbers = #tpu.dot_dimension_numbers<[1], [0], [0], [1], [0, 0, 1, 1], [], []>} : vector<1x8xbf16>, vector<8x32xbf16>, vector<1x32xf32> -> vector<1x32xf32>
    %c0_43 = arith.constant 0 : index
    %c0_44 = arith.constant 0 : index
    %60 = vector.load %arg13[%c0_43, %c0_44] : memref<32x32xbf16, #tpu.memory_space<vmem>>, vector<32x32xbf16>
    %cst_45 = arith.constant dense<0.000000e+00> : vector<1x32xf32>
    %61 = tpu.matmul %35, %60, %cst_45 {dimension_numbers = #tpu.dot_dimension_numbers<[1], [0], [0], [1], [0, 0, 1, 1], [], []>} : vector<1x32xbf16>, vector<32x32xbf16>, vector<1x32xf32> -> vector<1x32xf32>
    %62 = arith.truncf %59 : vector<1x32xf32> to vector<1x32xbf16>
    %c0_46 = arith.constant 0 : index
    %c0_47 = arith.constant 0 : index
    %63 = vector.load %arg14[%c0_46, %c0_47] : memref<32x32xbf16, #tpu.memory_space<vmem>>, vector<32x32xbf16>
    %cst_48 = arith.constant dense<0.000000e+00> : vector<1x32xf32>
    %64 = tpu.matmul %62, %63, %cst_48 {dimension_numbers = #tpu.dot_dimension_numbers<[1], [0], [0], [1], [0, 0, 1, 1], [], []>} : vector<1x32xbf16>, vector<32x32xbf16>, vector<1x32xf32> -> vector<1x32xf32>
    %65 = arith.addf %61, %64 : vector<1x32xf32>
    %c0_49 = arith.constant 0 : index
    %c0_50 = arith.constant 0 : index
    %66 = vector.load %arg15[%c0_49, %c0_50] : memref<1x32xf32, #tpu.memory_space<vmem>>, vector<1x32xf32>
    %67 = arith.addf %65, %66 : vector<1x32xf32>
    %68 = math.tanh %67 : vector<1x32xf32>
    %69 = arith.truncf %68 : vector<1x32xf32> to vector<1x32xbf16>
    %c0_51 = arith.constant 0 : index
    %c0_52 = arith.constant 0 : index
    %70 = vector.load %arg16[%c0_51, %c0_52] : memref<32x64xbf16, #tpu.memory_space<vmem>>, vector<32x64xbf16>
    %cst_53 = arith.constant dense<0.000000e+00> : vector<1x64xf32>
    %71 = tpu.matmul %69, %70, %cst_53 {dimension_numbers = #tpu.dot_dimension_numbers<[1], [0], [0], [1], [0, 0, 1, 1], [], []>} : vector<1x32xbf16>, vector<32x64xbf16>, vector<1x64xf32> -> vector<1x64xf32>
    %c0_54 = arith.constant 0 : index
    %c0_55 = arith.constant 0 : index
    %72 = vector.load %arg17[%c0_54, %c0_55] : memref<1x64xf32, #tpu.memory_space<vmem>>, vector<1x64xf32>
    %73 = arith.addf %71, %72 : vector<1x64xf32>
    %cst_56 = arith.constant dense<0xFF800000> : vector<1xf32>
    %74 = vector.multi_reduction <maximumf>, %73, %cst_56 [1] : vector<1x64xf32> to vector<1xf32>
    %75 = vector.shape_cast %74 : vector<1xf32> to vector<1x1xf32>
    %76 = vector.broadcast %75 : vector<1x1xf32> to vector<1x64xf32>
    %77 = arith.subf %73, %76 : vector<1x64xf32>
    %78 = math.exp %77 : vector<1x64xf32>
    %cst_57 = arith.constant dense<0.000000e+00> : vector<1xf32>
    %79 = vector.multi_reduction <add>, %78, %cst_57 [1] : vector<1x64xf32> to vector<1xf32>
    %80 = vector.shape_cast %79 : vector<1xf32> to vector<1x1xf32>
    %81 = math.log %80 : vector<1x1xf32>
    %82 = vector.broadcast %81 : vector<1x1xf32> to vector<1x64xf32>
    %83 = arith.subf %77, %82 : vector<1x64xf32>
    %c0_58 = arith.constant 0 : index
    %c0_59 = arith.constant 0 : index
    %84 = vector.load %arg18[%c0_58, %c0_59] : memref<1x64xf32, #tpu.memory_space<vmem>>, vector<1x64xf32>
    tpu.vector_store %arg18[%c0_58, %c0_59], %83 {strides = array<i32>} : memref<1x64xf32, #tpu.memory_space<vmem>>, vector<1x64xf32>,
    return
  }
}

</mosaic_0001>

<llo_original>
// kernel: tpu_custom_call.1
$region0: #{tpu_custom_call.1}
  #allocation0 [shape = 'u32[]', space=smem, size = 0x4, offset = 0x4, fixed_abs, tag = 'smem constant byte address 0x4 - core index']
  #allocation1 [shape = 'u32[72,128]{1,0:T(1,128)}', space=vmem, size = 0x9000, scoped, tag = 'internal scratch']
  %s0 = inlined_call_operand.hbm [shape: bf16[1,32], index: 0, kind: input, shape index: {}]
  %s1 = inlined_call_operand.hbm [shape: f32[1,32], index: 1, kind: input, shape index: {}]
  %s2 = inlined_call_operand.hbm [shape: f32[1,32], index: 2, kind: input, shape index: {}]
  %s3 = inlined_call_operand.hbm [shape: bf16[8,32], index: 3, kind: input, shape index: {}]
  %s4 = inlined_call_operand.vmem [shape: bf16[32,8], index: 4, kind: input, shape index: {}]
  %s5 = inlined_call_operand.hbm [shape: f32[1,8], index: 5, kind: input, shape index: {}]
  %s6 = inlined_call_operand.hbm [shape: f32[1,8], index: 6, kind: input, shape index: {}]
  %s7 = inlined_call_operand.vmem [shape: bf16[32,128], index: 7, kind: input, shape index: {}]
  %s8 = inlined_call_operand.hbm [shape: bf16[32,128], index: 8, kind: input, shape index: {}]
  %s9 = inlined_call_operand.hbm [shape: f32[1,128], index: 9, kind: input, shape index: {}]
  %s10 = inlined_call_operand.hbm [shape: bf16[32,32], index: 10, kind: input, shape index: {}]
  %s11 = inlined_call_operand.hbm [shape: bf16[8,32], index: 11, kind: input, shape index: {}]
  %s12 = inlined_call_operand.hbm [shape: f32[1,32], index: 12, kind: input, shape index: {}]
  %s13 = inlined_call_operand.vmem [shape: bf16[32,32], index: 13, kind: input, shape index: {}]
  %s14 = inlined_call_operand.hbm [shape: bf16[32,32], index: 14, kind: input, shape index: {}]
  %s15 = inlined_call_operand.vmem [shape: f32[1,32], index: 15, kind: input, shape index: {}]
  %s16 = inlined_call_operand.hbm [shape: bf16[32,64], index: 16, kind: input, shape index: {}]
  %s17 = inlined_call_operand.vmem [shape: f32[1,64], index: 17, kind: input, shape index: {}]
  %s18 = inlined_call_operand.hbm [shape: f32[1,64], index: 18, kind: output, shape index: {0}]
  %s19 = inlined_call_operand.hbm [shape: f32[1,32], index: 19, kind: output, shape index: {1}]
  %s20 = inlined_call_operand.hbm [shape: f32[1,32], index: 20, kind: output, shape index: {2}]
  %s21 = inlined_call_operand.hbm [shape: f32[1,8], index: 21, kind: output, shape index: {3}]
  %s22 = inlined_call_operand.hbm [shape: f32[1,8], index: 22, kind: output, shape index: {4}]
  %23 = xla_tuple %s18, %s19, %s20, %s21, %s22
  %s24 = sld [smem:[#allocation0]]
  $region166: #{tpu_custom_call.1} parent=0
    _
  %s26 = ssub.s32 1, %s24
  %s27 = scalar_select 0, %s26, %s24
  $region1: #{tpu_custom_call.1} parent=0
    #allocation2 [shape = 'u8[512]{0}', space=vmem, size = 0x400, scoped, tag = 'input window, operand 0, single buffered']
    #allocation3 [shape = 's32[1]{0}', space=sflag, size = 0x4, scoped, tag = 'scoped memory for tpu_custom_call.1']
    #allocation4 [shape = 's32[1]{0}', space=sflag, size = 0x4, scoped, tag = 'scoped memory for tpu_custom_call.1']
    #allocation5 [shape = 'u8[512]{0}', space=vmem, size = 0x400, scoped, tag = 'input window, operand 1, single buffered']
    #allocation6 [shape = 's32[1]{0}', space=sflag, size = 0x4, scoped, tag = 'scoped memory for tpu_custom_call.1']
    #allocation7 [shape = 'u8[512]{0}', space=vmem, size = 0x400, scoped, tag = 'input window, operand 2, single buffered']
    #allocation8 [shape = 'u8[2048]{0}', space=vmem, size = 0x800, scoped, tag = 'input window, operand 3, single buffered']
    #allocation9 [shape = 's32[1]{0}', space=sflag, size = 0x4, scoped, tag = 'scoped memory for tpu_custom_call.1']
    #allocation10 [shape = 'u8[512]{0}', space=vmem, size = 0x400, scoped, tag = 'input window, operand 5, single buffered']
    #allocation11 [shape = 'u8[512]{0}', space=vmem, size = 0x400, scoped, tag = 'input window, operand 6, single buffered']
    #allocation12 [shape = 's32[1]{0}', space=sflag, size = 0x4, scoped, tag = 'scoped memory for tpu_custom_call.1']
    #allocation13 [shape = 'u8[8192]{0}', space=vmem, size = 0x2000, scoped, tag = 'input window, operand 8, single buffered']
    #allocation14 [shape = 'u8[512]{0}', space=vmem, size = 0x400, scoped, tag = 'input window, operand 9, single buffered']
    #allocation15 [shape = 's32[1]{0}', space=sflag, size = 0x4, scoped, tag = 'scoped memory for tpu_custom_call.1']
    #allocation16 [shape = 'u8[8192]{0}', space=vmem, size = 0x2000, scoped, tag = 'input window, operand 10, single buffered']
    #allocation17 [shape = 'u8[2048]{0}', space=vmem, size = 0x800, scoped, tag = 'input window, operand 11, single buffered']
    #allocation18 [shape = 's32[1]{0}', space=sflag, size = 0x4, scoped, tag = 'scoped memory for tpu_custom_call.1']
    #allocation19 [shape = 'u8[512]{0}', space=vmem, size = 0x400, scoped, tag = 'input window, operand 12, single buffered']
    #allocation20 [shape = 'u8[8192]{0}', space=vmem, size = 0x2000, scoped, tag = 'input window, operand 14, single buffered']
    #allocation21 [shape = 's32[1]{0}', space=sflag, size = 0x4, scoped, tag = 'scoped memory for tpu_custom_call.1']
    #allocation22 [shape = 'u8[8192]{0}', space=vmem, size = 0x2000, scoped, tag = 'input window, operand 16, single buffered']
    #allocation23 [shape = 'u8[512]{0}', space=vmem, size = 0x400, scoped, tag = 'output window, operand 0, single buffered']
    #allocation24 [shape = 'u8[512]{0}', space=vmem, size = 0x400, scoped, tag = 'output window, operand 1, single buffered']
    #allocation25 [shape = 's32[1]{0}', space=sflag, size = 0x4, scoped, tag = 'scoped memory for tpu_custom_call.1']
    #allocation26 [shape = 'u8[512]{0}', space=vmem, size = 0x400, scoped, tag = 'output window, operand 2, single buffered']
    #allocation27 [shape = 'u8[512]{0}', space=vmem, size = 0x400, scoped, tag = 'output window, operand 3, single buffered']
    #allocation28 [shape = 's32[1]{0}', space=sflag, size = 0x4, scoped, tag = 'scoped memory for tpu_custom_call.1']
    #allocation29 [shape = 'u8[512]{0}', space=vmem, size = 0x400, scoped, tag = 'output window, operand 4, single buffered']
    %28 = vsyncpa [#allocation3], 0
    %29 = vsyncpa [#allocation6], 0
    %30 = vsyncpa [#allocation9], 0
    %31 = vsyncpa [#allocation12], 0
    %32 = vsyncpa [#allocation15], 0
    %33 = vsyncpa [#allocation18], 0
    %34 = vsyncpa [#allocation21], 0
    %35 = vsyncpa [#allocation4], 0
    %36 = vsyncpa [#allocation25], 0
    %37 = vsyncpa [#allocation28], 0
    // Predicated region
    $region2: #{tpu_custom_call.1} parent=1 // pred_check
      _
    $region3: #{tpu_custom_call.1} parent=1 // pred_check_branch
      %39 = sbr.rel (0) target = $region5
    $region4: #{tpu_custom_call.1} parent=1 // pred_region
      %41 = vsyncadd [#allocation3], 0
      %s43 = sshll.u32 %s0, 4
      %s44 = int_to_ptr.hbm [resolvable:$true] %s43
      %s45 = sshll.u32 [#allocation2], 4
      %s46 = int_to_ptr.vmem [resolvable:$true] %s45
      %48 = dma.hbm_to_vmem [thread:$0]  %s44, 16, %s46, [#allocation3]
    $region5: #{tpu_custom_call.1} parent=1 // pred_fallthru
      _
    // Predicated region
    $region6: #{tpu_custom_call.1} parent=1 // pred_check
      _
    $region7: #{tpu_custom_call.1} parent=1 // pred_check_branch
      %50 = sbr.rel (0) target = $region9
    $region8: #{tpu_custom_call.1} parent=1 // pred_region
      %52 = vsyncadd [#allocation6], 0
      %s54 = sshll.u32 %s1, 4
      %s55 = int_to_ptr.hbm [resolvable:$true] %s54
      %s56 = sshll.u32 [#allocation5], 4
      %s57 = int_to_ptr.vmem [resolvable:$true] %s56
      %59 = dma.hbm_to_vmem [thread:$0]  %s55, 16, %s57, [#allocation6]
    $region9: #{tpu_custom_call.1} parent=1 // pred_fallthru
      _
    // Predicated region
    $region10: #{tpu_custom_call.1} parent=1 // pred_check
      _
    $region11: #{tpu_custom_call.1} parent=1 // pred_check_branch
      %61 = sbr.rel (0) target = $region13
    $region12: #{tpu_custom_call.1} parent=1 // pred_region
      %63 = vsyncadd [#allocation6], 0
      %s65 = sshll.u32 %s2, 4
      %s66 = int_to_ptr.hbm [resolvable:$true] %s65
      %s67 = sshll.u32 [#allocation7], 4
      %s68 = int_to_ptr.vmem [resolvable:$true] %s67
      %70 = dma.hbm_to_vmem [thread:$0]  %s66, 16, %s68, [#allocation6]
    $region13: #{tpu_custom_call.1} parent=1 // pred_fallthru
      _
    // Predicated region
    $region14: #{tpu_custom_call.1} parent=1 // pred_check
      _
    $region15: #{tpu_custom_call.1} parent=1 // pred_check_branch
      %72 = sbr.rel (0) target = $region17
    $region16: #{tpu_custom_call.1} parent=1 // pred_region
      %74 = vsyncadd [#allocation9], 0
      %s76 = sshll.u32 %s3, 4
      %s77 = int_to_ptr.hbm [resolvable:$true] %s76
      %s78 = sshll.u32 [#allocation8], 4
      %s79 = int_to_ptr.vmem [resolvable:$true] %s78
      %81 = dma.hbm_to_vmem [thread:$0]  %s77, 64, %s79, [#allocation9]
    $region17: #{tpu_custom_call.1} parent=1 // pred_fallthru
      _
    // Predicated region
    $region18: #{tpu_custom_call.1} parent=1 // pred_check
      _
    $region19: #{tpu_custom_call.1} parent=1 // pred_check_branch
      %83 = sbr.rel (0) target = $region21
    $region20: #{tpu_custom_call.1} parent=1 // pred_region
      _
    $region21: #{tpu_custom_call.1} parent=1 // pred_fallthru
      _
    // Predicated region
    $region22: #{tpu_custom_call.1} parent=1 // pred_check
      _
    $region23: #{tpu_custom_call.1} parent=1 // pred_check_branch
      %85 = sbr.rel (0) target = $region25
    $region24: #{tpu_custom_call.1} parent=1 // pred_region
      %87 = vsyncadd [#allocation9], 0
      %s89 = sshll.u32 %s5, 4
      %s90 = int_to_ptr.hbm [resolvable:$true] %s89
      %s91 = sshll.u32 [#allocation10], 4
      %s92 = int_to_ptr.vmem [resolvable:$true] %s91
      %94 = dma.hbm_to_vmem [thread:$0]  %s90, 16, %s92, [#allocation9]
    $region25: #{tpu_custom_call.1} parent=1 // pred_fallthru
      _
    // Predicated region
    $region26: #{tpu_custom_call.1} parent=1 // pred_check
      _
    $region27: #{tpu_custom_call.1} parent=1 // pred_check_branch
      %96 = sbr.rel (0) target = $region29
    $region28: #{tpu_custom_call.1} parent=1 // pred_region
      %98 = vsyncadd [#allocation12], 0
      %s100 = sshll.u32 %s6, 4
      %s101 = int_to_ptr.hbm [resolvable:$true] %s100
      %s102 = sshll.u32 [#allocation11], 4
      %s103 = int_to_ptr.vmem [resolvable:$true] %s102
      %105 = dma.hbm_to_vmem [thread:$0]  %s101, 16, %s103, [#allocation12]
    $region29: #{tpu_custom_call.1} parent=1 // pred_fallthru
      _
    // Predicated region
    $region30: #{tpu_custom_call.1} parent=1 // pred_check
      _
    $region31: #{tpu_custom_call.1} parent=1 // pred_check_branch
      %107 = sbr.rel (0) target = $region33
    $region32: #{tpu_custom_call.1} parent=1 // pred_region
      _
    $region33: #{tpu_custom_call.1} parent=1 // pred_fallthru
      _
    // Predicated region
    $region34: #{tpu_custom_call.1} parent=1 // pred_check
      _
    $region35: #{tpu_custom_call.1} parent=1 // pred_check_branch
      %109 = sbr.rel (0) target = $region37
    $region36: #{tpu_custom_call.1} parent=1 // pred_region
      %111 = vsyncadd [#allocation12], 0
      %s112 = sshll.u32 %s8, 4
      %s113 = int_to_ptr.hbm [resolvable:$true] %s112
      %s114 = sshll.u32 [#allocation13], 4
      %s115 = int_to_ptr.vmem [resolvable:$true] %s114
      %120 = dma.hbm_to_vmem [thread:$0]  %s113, 256, %s115, [#allocation12], 64, 64, 4
    $region37: #{tpu_custom_call.1} parent=1 // pred_fallthru
      _
    // Predicated region
    $region38: #{tpu_custom_call.1} parent=1 // pred_check
      _
    $region39: #{tpu_custom_call.1} parent=1 // pred_check_branch
      %122 = sbr.rel (0) target = $region41
    $region40: #{tpu_custom_call.1} parent=1 // pred_region
      %124 = vsyncadd [#allocation15], 0
      %s126 = sshll.u32 %s9, 4
      %s127 = int_to_ptr.hbm [resolvable:$true] %s126
      %s128 = sshll.u32 [#allocation14], 4
      %s129 = int_to_ptr.vmem [resolvable:$true] %s128
      %131 = dma.hbm_to_vmem [thread:$0]  %s127, 16, %s129, [#allocation15]
    $region41: #{tpu_custom_call.1} parent=1 // pred_fallthru
      _
    // Predicated region
    $region42: #{tpu_custom_call.1} parent=1 // pred_check
      _
    $region43: #{tpu_custom_call.1} parent=1 // pred_check_branch
      %133 = sbr.rel (0) target = $region45
    $region44: #{tpu_custom_call.1} parent=1 // pred_region
      %135 = vsyncadd [#allocation15], 0
      %s136 = sshll.u32 %s10, 4
      %s137 = int_to_ptr.hbm [resolvable:$true] %s136
      %s138 = sshll.u32 [#allocation16], 4
      %s139 = int_to_ptr.vmem [resolvable:$true] %s138
      %144 = dma.hbm_to_vmem [thread:$0]  %s137, 256, %s139, [#allocation15], 64, 64, 4
    $region45: #{tpu_custom_call.1} parent=1 // pred_fallthru
      _
    // Predicated region
    $region46: #{tpu_custom_call.1} parent=1 // pred_check
      _
    $region47: #{tpu_custom_call.1} parent=1 // pred_check_branch
      %146 = sbr.rel (0) target = $region49
    $region48: #{tpu_custom_call.1} parent=1 // pred_region
      %148 = vsyncadd [#allocation18], 0
      %s150 = sshll.u32 %s11, 4
      %s151 = int_to_ptr.hbm [resolvable:$true] %s150
      %s152 = sshll.u32 [#allocation17], 4
      %s153 = int_to_ptr.vmem [resolvable:$true] %s152
      %155 = dma.hbm_to_vmem [thread:$0]  %s151, 64, %s153, [#allocation18]
    $region49: #{tpu_custom_call.1} parent=1 // pred_fallthru
      _
    // Predicated region
    $region50: #{tpu_custom_call.1} parent=1 // pred_check
      _
    $region51: #{tpu_custom_call.1} parent=1 // pred_check_branch
      %157 = sbr.rel (0) target = $region53
    $region52: #{tpu_custom_call.1} parent=1 // pred_region
      %159 = vsyncadd [#allocation18], 0
      %s161 = sshll.u32 %s12, 4
      %s162 = int_to_ptr.hbm [resolvable:$true] %s161
      %s163 = sshll.u32 [#allocation19], 4
      %s164 = int_to_ptr.vmem [resolvable:$true] %s163
      %166 = dma.hbm_to_vmem [thread:$0]  %s162, 16, %s164, [#allocation18]
    $region53: #{tpu_custom_call.1} parent=1 // pred_fallthru
      _
    // Predicated region
    $region54: #{tpu_custom_call.1} parent=1 // pred_check
      _
    $region55: #{tpu_custom_call.1} parent=1 // pred_check_branch
      %168 = sbr.rel (0) target = $region57
    $region56: #{tpu_custom_call.1} parent=1 // pred_region
      _
    $region57: #{tpu_custom_call.1} parent=1 // pred_fallthru
      _
    // Predicated region
    $region58: #{tpu_custom_call.1} parent=1 // pred_check
      _
    $region59: #{tpu_custom_call.1} parent=1 // pred_check_branch
      %170 = sbr.rel (0) target = $region61
    $region60: #{tpu_custom_call.1} parent=1 // pred_region
      %172 = vsyncadd [#allocation21], 0
      %s173 = sshll.u32 %s14, 4
      %s174 = int_to_ptr.hbm [resolvable:$true] %s173
      %s175 = sshll.u32 [#allocation20], 4
      %s176 = int_to_ptr.vmem [resolvable:$true] %s175
      %181 = dma.hbm_to_vmem [thread:$0]  %s174, 256, %s176, [#allocation21], 64, 64, 4
    $region61: #{tpu_custom_call.1} parent=1 // pred_fallthru
      _
    // Predicated region
    $region62: #{tpu_custom_call.1} parent=1 // pred_check
      _
    $region63: #{tpu_custom_call.1} parent=1 // pred_check_branch
      %183 = sbr.rel (0) target = $region65
    $region64: #{tpu_custom_call.1} parent=1 // pred_region
      _
    $region65: #{tpu_custom_call.1} parent=1 // pred_fallthru
      _
    // Predicated region
    $region66: #{tpu_custom_call.1} parent=1 // pred_check
      _
    $region67: #{tpu_custom_call.1} parent=1 // pred_check_branch
      %185 = sbr.rel (0) target = $region69
    $region68: #{tpu_custom_call.1} parent=1 // pred_region
      %187 = vsyncadd [#allocation21], 0
      %s188 = sshll.u32 %s16, 4
      %s189 = int_to_ptr.hbm [resolvable:$true] %s188
      %s190 = sshll.u32 [#allocation22], 4
      %s191 = int_to_ptr.vmem [resolvable:$true] %s190
      %196 = dma.hbm_to_vmem [thread:$0]  %s189, 256, %s191, [#allocation21], 64, 64, 4
    $region69: #{tpu_custom_call.1} parent=1 // pred_fallthru
      _
    // Predicated region
    $region70: #{tpu_custom_call.1} parent=1 // pred_check
      _
    $region71: #{tpu_custom_call.1} parent=1 // pred_check_branch
      %198 = sbr.rel (0) target = $region73
    $region72: #{tpu_custom_call.1} parent=1 // pred_region
      _
    $region73: #{tpu_custom_call.1} parent=1 // pred_fallthru
      _
    // Predicated region
    $region74: #{tpu_custom_call.1} parent=1 // pred_check
      _
    $region75: #{tpu_custom_call.1} parent=1 // pred_check_branch
      %200 = sbr.rel (0) target = $region77
    $region76: #{tpu_custom_call.1} parent=1 // pred_region
      %202 = dma.done [#allocation3], 16
    $region77: #{tpu_custom_call.1} parent=1 // pred_fallthru
      _
    // Predicated region
    $region78: #{tpu_custom_call.1} parent=1 // pred_check
      _
    $region79: #{tpu_custom_call.1} parent=1 // pred_check_branch
      %204 = sbr.rel (0) target = $region81
    $region80: #{tpu_custom_call.1} parent=1 // pred_region
      %206 = dma.done [#allocation6], 16
    $region81: #{tpu_custom_call.1} parent=1 // pred_fallthru
      _
    // Predicated region
    $region82: #{tpu_custom_call.1} parent=1 // pred_check
      _
    $region83: #{tpu_custom_call.1} parent=1 // pred_check_branch
      %208 = sbr.rel (0) target = $region85
    $region84: #{tpu_custom_call.1} parent=1 // pred_region
      %210 = dma.done [#allocation6], 16
    $region85: #{tpu_custom_call.1} parent=1 // pred_fallthru
      _
    // Predicated region
    $region86: #{tpu_custom_call.1} parent=1 // pred_check
      _
    $region87: #{tpu_custom_call.1} parent=1 // pred_check_branch
      %212 = sbr.rel (0) target = $region89
    $region88: #{tpu_custom_call.1} parent=1 // pred_region
      %214 = dma.done [#allocation9], 64
    $region89: #{tpu_custom_call.1} parent=1 // pred_fallthru
      _
    // Predicated region
    $region90: #{tpu_custom_call.1} parent=1 // pred_check
      _
    $region91: #{tpu_custom_call.1} parent=1 // pred_check_branch
      %216 = sbr.rel (0) target = $region93
    $region92: #{tpu_custom_call.1} parent=1 // pred_region
      %218 = dma.done [#allocation9], 16
    $region93: #{tpu_custom_call.1} parent=1 // pred_fallthru
      _
    // Predicated region
    $region94: #{tpu_custom_call.1} parent=1 // pred_check
      _
    $region95: #{tpu_custom_call.1} parent=1 // pred_check_branch
      %220 = sbr.rel (0) target = $region97
    $region96: #{tpu_custom_call.1} parent=1 // pred_region
      %222 = dma.done [#allocation12], 16
    $region97: #{tpu_custom_call.1} parent=1 // pred_fallthru
      _
    // Predicated region
    $region98: #{tpu_custom_call.1} parent=1 // pred_check
      _
    $region99: #{tpu_custom_call.1} parent=1 // pred_check_branch
      %224 = sbr.rel (0) target = $region101
    $region100: #{tpu_custom_call.1} parent=1 // pred_region
      %226 = dma.done [#allocation12], 256
    $region101: #{tpu_custom_call.1} parent=1 // pred_fallthru
      _
    // Predicated region
    $region102: #{tpu_custom_call.1} parent=1 // pred_check
      _
    $region103: #{tpu_custom_call.1} parent=1 // pred_check_branch
      %228 = sbr.rel (0) target = $region105
    $region104: #{tpu_custom_call.1} parent=1 // pred_region
      %230 = dma.done [#allocation15], 16
    $region105: #{tpu_custom_call.1} parent=1 // pred_fallthru
      _
    // Predicated region
    $region106: #{tpu_custom_call.1} parent=1 // pred_check
      _
    $region107: #{tpu_custom_call.1} parent=1 // pred_check_branch
      %232 = sbr.rel (0) target = $region109
    $region108: #{tpu_custom_call.1} parent=1 // pred_region
      %234 = dma.done [#allocation15], 256
    $region109: #{tpu_custom_call.1} parent=1 // pred_fallthru
      _
    // Predicated region
    $region110: #{tpu_custom_call.1} parent=1 // pred_check
      _
    $region111: #{tpu_custom_call.1} parent=1 // pred_check_branch
      %236 = sbr.rel (0) target = $region113
    $region112: #{tpu_custom_call.1} parent=1 // pred_region
      %238 = dma.done [#allocation18], 64
    $region113: #{tpu_custom_call.1} parent=1 // pred_fallthru
      _
    // Predicated region
    $region114: #{tpu_custom_call.1} parent=1 // pred_check
      _
    $region115: #{tpu_custom_call.1} parent=1 // pred_check_branch
      %240 = sbr.rel (0) target = $region117
    $region116: #{tpu_custom_call.1} parent=1 // pred_region
      %242 = dma.done [#allocation18], 16
    $region117: #{tpu_custom_call.1} parent=1 // pred_fallthru
      _
    // Predicated region
    $region118: #{tpu_custom_call.1} parent=1 // pred_check
      _
    $region119: #{tpu_custom_call.1} parent=1 // pred_check_branch
      %244 = sbr.rel (0) target = $region121
    $region120: #{tpu_custom_call.1} parent=1 // pred_region
      %246 = dma.done [#allocation21], 256
    $region121: #{tpu_custom_call.1} parent=1 // pred_fallthru
      _
    // Predicated region
    $region122: #{tpu_custom_call.1} parent=1 // pred_check
      _
    $region123: #{tpu_custom_call.1} parent=1 // pred_check_branch
      %248 = sbr.rel (0) target = $region125
    $region124: #{tpu_custom_call.1} parent=1 // pred_region
      %250 = dma.done [#allocation21], 256
    $region125: #{tpu_custom_call.1} parent=1 // pred_fallthru
      _
    %v252 = vld [vmem:[#allocation10] sm:$0x1]
    %v253 = vld [vmem:[#allocation11] sm:$0x1]
    %v254 = vadd.f32 %v252, %v253
    %vm255 = vcmask 57344
    %256 = vst.msk [vmem:[#allocation27] sm:$0x1] %vm255, %v254
    %v257 = vld [vmem:[#allocation2] sm:$0x1]
    %v258 = vld [vmem:[%s7] sm:$0xf]
    %v259 = vld [vmem:[%s7 + $0x4] sm:$0xf]
    %v260 = vld [vmem:[%s7 + $0x8] sm:$0xf]
    %v261 = vld [vmem:[%s7 + $0xc] sm:$0xf]
    %v262 = vld [vmem:[#allocation14] sm:$0x1]
    %v267 = vunpack.c.l.b16 %v258
    %v268 = vunpack.c.l.b16 %v259
    %v269 = vunpack.c.l.b16 %v260
    %v270 = vunpack.c.l.b16 %v261
    %v271 = vpack.c.b16 %v268, %v267
    %v272 = vpack.c.b16 %v270, %v269
    %vm275 = vcmask 261120
    %v277 = vsel %vm275, %v257, 0
    %279 = vmatpush.bf16.msra.mxu0 0
    %280 = vmatpush.bf16.msra.mxu0 0
    %281 = vmatpush.bf16.msra.mxu0 0
    %282 = vmatpush.bf16.msra.mxu0 0
    %283 = vmatpush.bf16.msra.mxu0 0
    %284 = vmatpush.bf16.msra.mxu0 0
    %285 = vmatpush.bf16.msra.mxu0 %v272
    %286 = vmatpush.bf16.msra.mxu0 %v271
    %287 = vmatmul.bf16.gmra.mxu0 %v277
    %v288 = vpop.f32.mrf.mxu0
    %v289 = vadd.f32 %v262, %v288
    %v290 = vpop.f32.mrf.mxu0
    %291 = vdwg.mxu0
    %v292 = vld [vmem:[#allocation13] sm:$0xf]
    %v293 = vld [vmem:[#allocation13 + $0x4] sm:$0xf]
    %v294 = vld [vmem:[#allocation13 + $0x8] sm:$0xf]
    %v295 = vld [vmem:[#allocation13 + $0xc] sm:$0xf]
    %v296 = vld [vmem:[#allocation5] sm:$0x1]
    %v297 = vld [vmem:[#allocation7] sm:$0x1]
    %v298 = vpack.c.bf16 %v296, %v296
    %v303 = vunpack.c.l.b16 %v292
    %v304 = vunpack.c.l.b16 %v293
    %v305 = vunpack.c.l.b16 %v294
    %v306 = vunpack.c.l.b16 %v295
    %v307 = vpack.c.b16 %v304, %v303
    %v308 = vpack.c.b16 %v306, %v305
    %v312 = vsel %vm275, %v298, 0
    %314 = vmatpush.bf16.msra.mxu0 0
    %315 = vmatpush.bf16.msra.mxu0 0
    %316 = vmatpush.bf16.msra.mxu0 0
    %317 = vmatpush.bf16.msra.mxu0 0
    %318 = vmatpush.bf16.msra.mxu0 0
    %319 = vmatpush.bf16.msra.mxu0 0
    %320 = vmatpush.bf16.msra.mxu0 %v308
    %321 = vmatpush.bf16.msra.mxu0 %v307
    %322 = vmatmul.bf16.gmra.mxu0 %v312
    %v323 = vpop.f32.mrf.mxu0
    %v324 = vadd.f32 0.0, %v323
    %v325 = vpop.f32.mrf.mxu0
    %326 = vdwg.mxu0
    %v327 = vadd.f32 %v289, %v324
    %v328 = vmul.f32 %v327, 0.5
    %v329 = vtanh.pop %v328
    %v330 = vmul.f32 %v329, 0.5
    %v331 = vadd.f32 %v330, 0.5
    %v332 = vtanh.pop %v327
    %v334 = vperm.slane %v297, 0
    %335 = vrot.lane.b32.xlu0 %v334, 32
    %v336 = vpop.permute.xlu0 %335
    %v338 = vmul.f32 %v331, %v336
    %340 = vrot.lane.b32.xlu0 %v332, 32
    %v341 = vpop.permute.xlu0 %340
    %v343 = vmul.f32 %v331, %v341
    %345 = vrot.lane.b32.xlu0 %v343, 32
    %v346 = vpop.permute.xlu0 %345
    %v348 = vadd.f32 %v338, %v346
    %v349 = vtanh.pop %v348
    %351 = vrot.lane.b32.xlu0 %v349, 32
    %v352 = vpop.permute.xlu0 %351
    %v354 = vmul.f32 %v331, %v352
    %356 = vrot.lane.b32.xlu0 %v354, 64
    %v357 = vpop.permute.xlu0 %356
    %vm359 = vcmask 253952
    %360 = vst.msk [vmem:[#allocation24] sm:$0x1] %vm359, %v357
    %362 = vrot.lane.b32.xlu0 %v348, 96
    %v363 = vpop.permute.xlu0 %362
    %365 = vst.msk [vmem:[#allocation26] sm:$0x1] %vm359, %v363
    %v366 = vpack.c.bf16 %v354, %v354
    %v367 = vld [vmem:[#allocation16] sm:$0xf]
    %v368 = vld [vmem:[#allocation16 + $0x4] sm:$0xf]
    %v369 = vld [vmem:[#allocation16 + $0x8] sm:$0xf]
    %v370 = vld [vmem:[#allocation16 + $0xc] sm:$0xf]
    %v371 = vpack.c.bf16 %v254, %v254
    %v372 = vld [vmem:[#allocation17] sm:$0xf]
    %vm373 = vcmask 64512
    %v375 = vsel %vm373, %v371, 0
    %vm377 = vcmask 1043456
    %v379 = vsel %vm377, %v372, 0
    %381 = vmatpush.bf16.msra.mxu0 0
    %382 = vmatpush.bf16.msra.mxu0 0
    %383 = vmatpush.bf16.msra.mxu0 0
    %384 = vmatpush.bf16.msra.mxu0 0
    %385 = vmatpush.bf16.msra.mxu0 0
    %386 = vmatpush.bf16.msra.mxu0 0
    %387 = vmatpush.bf16.msra.mxu0 0
    %388 = vmatpush.bf16.msra.mxu0 %v379
    %389 = vmatmul.bf16.gmra.mxu0 %v375
    %v390 = vpop.f32.mrf.mxu0
    %v391 = vadd.f32 0.0, %v390
    %v392 = vpop.f32.mrf.mxu0
    %393 = vdwg.mxu0
    %395 = vrot.lane.b32.xlu0 %v366, 64
    %v396 = vpop.permute.xlu0 %395
    %v401 = vunpack.c.l.b16 %v367
    %v402 = vunpack.c.l.b16 %v368
    %v403 = vunpack.c.l.b16 %v369
    %v404 = vunpack.c.l.b16 %v370
    %v405 = vpack.c.b16 %v402, %v401
    %v406 = vpack.c.b16 %v404, %v403
    %v410 = vsel %vm275, %v396, 0
    %412 = vmatpush.bf16.msra.mxu0 0
    %413 = vmatpush.bf16.msra.mxu0 0
    %414 = vmatpush.bf16.msra.mxu0 0
    %415 = vmatpush.bf16.msra.mxu0 0
    %416 = vmatpush.bf16.msra.mxu0 0
    %417 = vmatpush.bf16.msra.mxu0 0
    %418 = vmatpush.bf16.msra.mxu0 %v406
    %419 = vmatpush.bf16.msra.mxu0 %v405
    %420 = vmatmul.bf16.gmra.mxu0 %v410
    %v421 = vpop.f32.mrf.mxu0
    %v422 = vadd.f32 %v391, %v421
    %v423 = vpop.f32.mrf.mxu0
    %424 = vdwg.mxu0
    %v425 = vld [vmem:[#allocation19] sm:$0x1]
    %v426 = vadd.f32 %v422, %v425
    %v427 = vpack.c.bf16 %v426, %v426
    %v428 = vld [vmem:[%s4] sm:$0xf]
    %v429 = vld [vmem:[%s4 + $0x4] sm:$0xf]
    %v430 = vld [vmem:[%s4 + $0x8] sm:$0xf]
    %v431 = vld [vmem:[%s4 + $0xc] sm:$0xf]
    %v436 = vunpack.c.l.b16 %v428
    %v437 = vunpack.c.l.b16 %v429
    %v438 = vunpack.c.l.b16 %v430
    %v439 = vunpack.c.l.b16 %v431
    %v440 = vpack.c.b16 %v437, %v436
    %v441 = vpack.c.b16 %v439, %v438
    %v445 = vsel %vm275, %v427, 0
    %447 = vmatpush.bf16.msra.mxu0 0
    %448 = vmatpush.bf16.msra.mxu0 0
    %449 = vmatpush.bf16.msra.mxu0 0
    %450 = vmatpush.bf16.msra.mxu0 0
    %451 = vmatpush.bf16.msra.mxu0 0
    %452 = vmatpush.bf16.msra.mxu0 0
    %453 = vmatpush.bf16.msra.mxu0 %v441
    %454 = vmatpush.bf16.msra.mxu0 %v440
    %455 = vmatmul.bf16.gmra.mxu0 %v445
    %v456 = vpop.f32.mrf.mxu0
    %v457 = vadd.f32 0.0, %v456
    %v458 = vpop.f32.mrf.mxu0
    %459 = vdwg.mxu0
    %v460 = vsel %vm255, %v457, -inf
    %461 = vmax.xlane.f32.xlu0 %v460
    %v462 = vpop.xlane.xlu0 %461
    %v463 = vsub.f32 %v457, %v462
    %v464 = vmul.f32 %v463, 1.442695
    %v465 = vpow.pop %v464
    %v466 = vsel %vm255, %v465, 0.0
    %467 = vadd.xlane.f32.xlu0 %v466
    %v468 = vpop.xlane.xlu0 %467
    %v469 = vrcp.pop %v468
    %v470 = vmul.f32 %v468, %v469
    %v471 = vsub.f32 1.0, %v470
    %v472 = vmul.f32 %v469, %v471
    %v473 = vadd.f32 %v469, %v472
    %vm474 = vweird.f32 %v468
    %vm475 = vweird.f32 %v469
    %vm476 = vmor %vm474, %vm475
    %v477 = vsel %vm476, %v469, %v473
    %v478 = vand.u32 2147483647, %v468
    %vm479 = vcmp.eq.f32.partialorder %v478, 8.507059e+37
    %v480 = vand.u32 %v468, 2147483648
    %v481 = vor.u32 1.1754944e-38, %v480
    %v482 = vsel %vm479, %v481, %v477
    %v483 = vmul.f32 %v465, %v482
    %484 = vst.msk [vmem:[#allocation29] sm:$0x1] %vm255, %v483
    %v485 = vpack.c.bf16 %v483, %v483
    %v486 = vld [vmem:[#allocation8] sm:$0xf]
    %v488 = vsel %vm373, %v485, 0
    %v491 = vsel %vm377, %v486, 0
    %493 = vmatpush.bf16.msra.mxu0 0
    %494 = vmatpush.bf16.msra.mxu0 0
    %495 = vmatpush.bf16.msra.mxu0 0
    %496 = vmatpush.bf16.msra.mxu0 0
    %497 = vmatpush.bf16.msra.mxu0 0
    %498 = vmatpush.bf16.msra.mxu0 0
    %499 = vmatpush.bf16.msra.mxu0 0
    %500 = vmatpush.bf16.msra.mxu0 %v491
    %501 = vmatmul.bf16.gmra.mxu0 %v488
    %v502 = vpop.f32.mrf.mxu0
    %v503 = vadd.f32 0.0, %v502
    %v504 = vpop.f32.mrf.mxu0
    %505 = vdwg.mxu0
    %v506 = vld [vmem:[%s13] sm:$0xf]
    %v507 = vld [vmem:[%s13 + $0x4] sm:$0xf]
    %v508 = vld [vmem:[%s13 + $0x8] sm:$0xf]
    %v509 = vld [vmem:[%s13 + $0xc] sm:$0xf]
    %v510 = vpack.c.bf16 %v503, %v503
    %v511 = vld [vmem:[#allocation20] sm:$0xf]
    %v512 = vld [vmem:[#allocation20 + $0x4] sm:$0xf]
    %v513 = vld [vmem:[#allocation20 + $0x8] sm:$0xf]
    %v514 = vld [vmem:[#allocation20 + $0xc] sm:$0xf]
    %v519 = vunpack.c.l.b16 %v511
    %v520 = vunpack.c.l.b16 %v512
    %v521 = vunpack.c.l.b16 %v513
    %v522 = vunpack.c.l.b16 %v514
    %v523 = vpack.c.b16 %v520, %v519
    %v524 = vpack.c.b16 %v522, %v521
    %v528 = vsel %vm275, %v510, 0
    %530 = vmatpush.bf16.msra.mxu0 0
    %531 = vmatpush.bf16.msra.mxu0 0
    %532 = vmatpush.bf16.msra.mxu0 0
    %533 = vmatpush.bf16.msra.mxu0 0
    %534 = vmatpush.bf16.msra.mxu0 0
    %535 = vmatpush.bf16.msra.mxu0 0
    %536 = vmatpush.bf16.msra.mxu0 %v524
    %537 = vmatpush.bf16.msra.mxu0 %v523
    %538 = vmatmul.bf16.gmra.mxu0 %v528
    %v539 = vpop.f32.mrf.mxu0
    %v540 = vadd.f32 0.0, %v539
    %v541 = vpop.f32.mrf.mxu0
    %542 = vdwg.mxu0
    %v547 = vunpack.c.l.b16 %v506
    %v548 = vunpack.c.l.b16 %v507
    %v549 = vunpack.c.l.b16 %v508
    %v550 = vunpack.c.l.b16 %v509
    %v551 = vpack.c.b16 %v548, %v547
    %v552 = vpack.c.b16 %v550, %v549
    %555 = vmatpush.bf16.msra.mxu0 0
    %556 = vmatpush.bf16.msra.mxu0 0
    %557 = vmatpush.bf16.msra.mxu0 0
    %558 = vmatpush.bf16.msra.mxu0 0
    %559 = vmatpush.bf16.msra.mxu0 0
    %560 = vmatpush.bf16.msra.mxu0 0
    %561 = vmatpush.bf16.msra.mxu0 %v552
    %562 = vmatpush.bf16.msra.mxu0 %v551
    %563 = vmatmul.bf16.gmra.mxu0 %v410
    %v564 = vpop.f32.mrf.mxu0
    %v565 = vadd.f32 %v540, %v564
    %v566 = vpop.f32.mrf.mxu0
    %567 = vdwg.mxu0
    %v568 = vld [vmem:[%s15] sm:$0x1]
    %v569 = vadd.f32 %v565, %v568
    %v570 = vtanh.pop %v569
    %v571 = vpack.c.bf16 %v570, %v570
    %v572 = vld [vmem:[#allocation22] sm:$0xf]
    %v573 = vld [vmem:[#allocation22 + $0x4] sm:$0xf]
    %v574 = vld [vmem:[#allocation22 + $0x8] sm:$0xf]
    %v575 = vld [vmem:[#allocation22 + $0xc] sm:$0xf]
    %v576 = vld [vmem:[%s17] sm:$0x1]
    %v581 = vunpack.c.l.b16 %v572
    %v582 = vunpack.c.l.b16 %v573
    %v583 = vunpack.c.l.b16 %v574
    %v584 = vunpack.c.l.b16 %v575
    %v585 = vpack.c.b16 %v582, %v581
    %v586 = vpack.c.b16 %v584, %v583
    %v590 = vsel %vm275, %v571, 0
    %592 = vmatpush.bf16.msra.mxu0 0
    %593 = vmatpush.bf16.msra.mxu0 0
    %594 = vmatpush.bf16.msra.mxu0 0
    %595 = vmatpush.bf16.msra.mxu0 0
    %596 = vmatpush.bf16.msra.mxu0 0
    %597 = vmatpush.bf16.msra.mxu0 0
    %598 = vmatpush.bf16.msra.mxu0 %v586
    %599 = vmatpush.bf16.msra.mxu0 %v585
    %600 = vmatmul.bf16.gmra.mxu0 %v590
    %v601 = vpop.f32.mrf.mxu0
    %v602 = vadd.f32 %v576, %v601
    %v603 = vpop.f32.mrf.mxu0
    %604 = vdwg.mxu0
    %vm605 = vcmask 516096
    %v606 = vsel %vm605, %v602, -inf
    %607 = vmax.xlane.f32.xlu0 %v606
    %v608 = vpop.xlane.xlu0 %607
    %v609 = vsub.f32 %v602, %v608
    %v610 = vmul.f32 %v609, 1.442695
    %v611 = vpow.pop %v610
    %v612 = vsel %vm605, %v611, 0.0
    %613 = vadd.xlane.f32.xlu0 %v612
    %v614 = vpop.xlane.xlu0 %613
    %v615 = vlog2.pop %v614
    %v616 = vmul.f32 %v615, 0.6931472
    %v617 = vsub.f32 %v609, %v616
    %618 = vst.msk [vmem:[#allocation23] sm:$0x1] %vm605, %v617
    // Predicated region
    $region126: #{tpu_custom_call.1} parent=1 // pred_check
      _
    $region127: #{tpu_custom_call.1} parent=1 // pred_check_branch
      %620 = sbr.rel (0) target = $region129
    $region128: #{tpu_custom_call.1} parent=1 // pred_region
      %622 = vsyncadd [#allocation4], 0
      %s624 = sshll.u32 [#allocation23], 4
      %s625 = int_to_ptr.vmem [resolvable:$true] %s624
      %s626 = sshll.u32 %s18, 4
      %s627 = int_to_ptr.hbm [resolvable:$true] %s626
      %629 = dma.vmem_to_hbm [thread:$0]  %s625, 16, %s627, [#allocation4]
    $region129: #{tpu_custom_call.1} parent=1 // pred_fallthru
      _
    // Predicated region
    $region130: #{tpu_custom_call.1} parent=1 // pred_check
      _
    $region131: #{tpu_custom_call.1} parent=1 // pred_check_branch
      %631 = sbr.rel (0) target = $region133
    $region132: #{tpu_custom_call.1} parent=1 // pred_region
      %633 = vsyncadd [#allocation25], 0
      %s635 = sshll.u32 [#allocation24], 4
      %s636 = int_to_ptr.vmem [resolvable:$true] %s635
      %s637 = sshll.u32 %s19, 4
      %s638 = int_to_ptr.hbm [resolvable:$true] %s637
      %640 = dma.vmem_to_hbm [thread:$0]  %s636, 16, %s638, [#allocation25]
    $region133: #{tpu_custom_call.1} parent=1 // pred_fallthru
      _
    // Predicated region
    $region134: #{tpu_custom_call.1} parent=1 // pred_check
      _
    $region135: #{tpu_custom_call.1} parent=1 // pred_check_branch
      %642 = sbr.rel (0) target = $region137
    $region136: #{tpu_custom_call.1} parent=1 // pred_region
      %644 = vsyncadd [#allocation25], 0
      %s646 = sshll.u32 [#allocation26], 4
      %s647 = int_to_ptr.vmem [resolvable:$true] %s646
      %s648 = sshll.u32 %s20, 4
      %s649 = int_to_ptr.hbm [resolvable:$true] %s648
      %651 = dma.vmem_to_hbm [thread:$0]  %s647, 16, %s649, [#allocation25]
    $region137: #{tpu_custom_call.1} parent=1 // pred_fallthru
      _
    // Predicated region
    $region138: #{tpu_custom_call.1} parent=1 // pred_check
      _
    $region139: #{tpu_custom_call.1} parent=1 // pred_check_branch
      %653 = sbr.rel (0) target = $region141
    $region140: #{tpu_custom_call.1} parent=1 // pred_region
      %655 = vsyncadd [#allocation28], 0
      %s657 = sshll.u32 [#allocation27], 4
      %s658 = int_to_ptr.vmem [resolvable:$true] %s657
      %s659 = sshll.u32 %s21, 4
      %s660 = int_to_ptr.hbm [resolvable:$true] %s659
      %662 = dma.vmem_to_hbm [thread:$0]  %s658, 16, %s660, [#allocation28]
    $region141: #{tpu_custom_call.1} parent=1 // pred_fallthru
      _
    // Predicated region
    $region142: #{tpu_custom_call.1} parent=1 // pred_check
      _
    $region143: #{tpu_custom_call.1} parent=1 // pred_check_branch
      %664 = sbr.rel (0) target = $region145
    $region144: #{tpu_custom_call.1} parent=1 // pred_region
      %666 = vsyncadd [#allocation28], 0
      %s668 = sshll.u32 [#allocation29], 4
      %s669 = int_to_ptr.vmem [resolvable:$true] %s668
      %s670 = sshll.u32 %s22, 4
      %s671 = int_to_ptr.hbm [resolvable:$true] %s670
      %673 = dma.vmem_to_hbm [thread:$0]  %s669, 16, %s671, [#allocation28]
    $region145: #{tpu_custom_call.1} parent=1 // pred_fallthru
      _
    // Predicated region
    $region146: #{tpu_custom_call.1} parent=1 // pred_check
      _
    $region147: #{tpu_custom_call.1} parent=1 // pred_check_branch
      %675 = sbr.rel (0) target = $region149
    $region148: #{tpu_custom_call.1} parent=1 // pred_region
      %677 = dma.done [#allocation4], 16
    $region149: #{tpu_custom_call.1} parent=1 // pred_fallthru
      _
    // Predicated region
    $region150: #{tpu_custom_call.1} parent=1 // pred_check
      _
    $region151: #{tpu_custom_call.1} parent=1 // pred_check_branch
      %679 = sbr.rel (0) target = $region153
    $region152: #{tpu_custom_call.1} parent=1 // pred_region
      %681 = dma.done [#allocation25], 16
    $region153: #{tpu_custom_call.1} parent=1 // pred_fallthru
      _
    // Predicated region
    $region154: #{tpu_custom_call.1} parent=1 // pred_check
      _
    $region155: #{tpu_custom_call.1} parent=1 // pred_check_branch
      %683 = sbr.rel (0) target = $region157
    $region156: #{tpu_custom_call.1} parent=1 // pred_region
      %685 = dma.done [#allocation25], 16
    $region157: #{tpu_custom_call.1} parent=1 // pred_fallthru
      _
    // Predicated region
    $region158: #{tpu_custom_call.1} parent=1 // pred_check
      _
    $region159: #{tpu_custom_call.1} parent=1 // pred_check_branch
      %687 = sbr.rel (0) target = $region161
    $region160: #{tpu_custom_call.1} parent=1 // pred_region
      %689 = dma.done [#allocation28], 16
    $region161: #{tpu_custom_call.1} parent=1 // pred_fallthru
      _
    // Predicated region
    $region162: #{tpu_custom_call.1} parent=1 // pred_check
      _
    $region163: #{tpu_custom_call.1} parent=1 // pred_check_branch
      %691 = sbr.rel (0) target = $region165
    $region164: #{tpu_custom_call.1} parent=1 // pred_region
      %693 = dma.done [#allocation28], 16
    $region165: #{tpu_custom_call.1} parent=1 // pred_fallthru
      _
    %694 = vsyncpa [#allocation3], 1
    %695 = vsyncpa [#allocation6], 1
    %696 = vsyncpa [#allocation9], 1
    %697 = vsyncpa [#allocation12], 1
    %698 = vsyncpa [#allocation15], 1
    %699 = vsyncpa [#allocation18], 1
    %700 = vsyncpa [#allocation21], 1
    %701 = vsyncpa [#allocation4], 1
    %702 = vsyncpa [#allocation25], 1
    %703 = vsyncpa [#allocation28], 1

</llo_original>
